<compile_context>
chip_gen: v5e
topology: v5e:2x2
jax: 0.10.0
libtpu: 0.0.40
codegen_flags: <defaults>
</compile_context>

<pallas_src>
import functools

import jax
import jax.numpy as jnp
from jax.experimental import pallas as pl
from jax.experimental.pallas import tpu as pltpu

_PAD_N = 128  # lane-dense width for the padded logits head


def _round_up(x, m):
    return ((x + m - 1) // m) * m


def _mlp_head_kernel(x_ref, w1_ref, b1_ref, w2_ref, b2_ref, w3_ref, b3_ref,
                     feat_ref, logits_ref):
    """Fused MLP hot path for one batch tile.

    relu(x@W1+b1) @ W2 + b2 -> features ; features @ W3p + b3p -> padded logits.
    x/W1/W2 are bf16 (MXU native), accumulation and epilogues are fp32.
    """
    x = x_ref[...]                                                     # (TM, E) bf16

    # Layer 1: Linear(E, E) + ReLU.  bf16 MXU pass, fp32 accumulate, fp32 epilogue.
    h = jnp.dot(x, w1_ref[...], preferred_element_type=jnp.float32) + b1_ref[...]
    h = jnp.maximum(h, 0.0)                                            # (TM, E) fp32

    # Layer 2: Linear(E, E//2) -> contrastive features.  bf16 MXU pass, fp32 accumulate.
    feat = jnp.dot(h.astype(jnp.bfloat16), w2_ref[...],
                   preferred_element_type=jnp.float32) + b2_ref[...]   # (TM, E2) fp32
    feat_ref[...] = feat.astype(feat_ref.dtype)

    # Head: Linear(E//2, 128-padded) -> logits.  Kept fully fp32 (tiny matmul,
    # avoids bf16 rounding on the feat->logits chain).
    logits = jnp.dot(feat, w3_ref[...], preferred_element_type=jnp.float32) + b3_ref[...]
    logits_ref[...] = logits.astype(logits_ref.dtype)                  # (TM, 128) fp32


@functools.partial(jax.jit, static_argnames=("tm",))
def esm_contrastive_forward(x, params, tm=None):
    """Pallas forward. Returns {'logits', 'features'} (contrastive_output=True path)."""
    w1, b1 = params["w1"], params["b1"]
    w2, b2 = params["w2"], params["b2"]
    w3, b3 = params["w3"], params["b3"]

    B, E = x.shape
    E2 = w2.shape[1]
    n_cls = w3.shape[1]

    # ---- batch tile choice -------------------------------------------------
    # Fill the MXU M dimension when the batch allows it (256 on v6e/v7x); for
    # small batches just round up to the sublane multiple.
    if tm is None:
        tm = 256 if B >= 256 else _round_up(B, 8)
    Bp = _round_up(B, tm)
    if Bp != B:
        x = jnp.pad(x, ((0, Bp - B), (0, 0)))

    # ---- dtype / padding plumbing -----------------------------------------
    xb = x.astype(jnp.bfloat16)
    w1b = w1.astype(jnp.bfloat16)
    w2b = w2.astype(jnp.bfloat16)
    b1f = b1.astype(jnp.float32)
    b2f = b2.astype(jnp.float32)
    # Lane-dense head: zero-pad the 3-wide weights/bias to 128 columns.
    w3p = jnp.zeros((E2, _PAD_N), jnp.float32).at[:, :n_cls].set(w3.astype(jnp.float32))
    b3p = jnp.zeros((1, _PAD_N), jnp.float32).at[:, :n_cls].set(b3.astype(jnp.float32))

    grid = (Bp // tm,)

    flops = 2 * Bp * (E * E + E * E2 + E2 * _PAD_N)
    bytes_accessed = (xb.size * 2 + w1b.size * 2 + w2b.size * 2
                      + b1f.size * 4 + b2f.size * 4 + w3p.size * 4 + b3p.size * 4
                      + Bp * E2 * 4 + Bp * _PAD_N * 4)

    feat, logits_padded = pl.pallas_call(
        _mlp_head_kernel,
        out_shape=(
            jax.ShapeDtypeStruct((Bp, E2), jnp.float32),
            jax.ShapeDtypeStruct((Bp, _PAD_N), jnp.float32),
        ),
        grid=grid,
        in_specs=[
            pl.BlockSpec((tm, E), lambda i: (i, 0)),        # x tile (pipelined)
            pl.BlockSpec((E, E), lambda i: (0, 0)),         # w1 (resident)
            pl.BlockSpec((1, E), lambda i: (0, 0)),         # b1
            pl.BlockSpec((E, E2), lambda i: (0, 0)),        # w2
            pl.BlockSpec((1, E2), lambda i: (0, 0)),        # b2
            pl.BlockSpec((E2, _PAD_N), lambda i: (0, 0)),   # w3 (padded)
            pl.BlockSpec((1, _PAD_N), lambda i: (0, 0)),    # b3 (padded)
        ],
        out_specs=(
            pl.BlockSpec((tm, E2), lambda i: (i, 0)),       # features tile
            pl.BlockSpec((tm, _PAD_N), lambda i: (i, 0)),   # padded logits tile
        ),
        compiler_params=pltpu.CompilerParams(
            dimension_semantics=("parallel",),              # megacore on v7x
        ),
        cost_estimate=pl.CostEstimate(
            flops=flops, transcendentals=0, bytes_accessed=bytes_accessed),
    )(xb, w1b, b1f, w2b, b2f, w3p, b3p)

    return {"logits": logits_padded[:B, :n_cls], "features": feat[:B]}


def init_params(key, E, n_cls=3):
    """Deterministic nn.Linear-style init: U(-1/sqrt(fan_in), 1/sqrt(fan_in)).

    Weights stored (in_features, out_features) so y = x @ W + b matches PyTorch's
    y = x @ W.T + b with W of shape (out, in).  Biases kept as (1, out) rows.
    """
    E2 = E // 2
    ks = jax.random.split(key, 6)

    def lin(kw, kb, fan_in, fan_out):
        bound = 1.0 / jnp.sqrt(fan_in)
        w = jax.random.uniform(kw, (fan_in, fan_out), jnp.float32, -bound, bound)
        b = jax.random.uniform(kb, (1, fan_out), jnp.float32, -bound, bound)
        return w, b

    w1, b1 = lin(ks[0], ks[1], E, E)
    w2, b2 = lin(ks[2], ks[3], E, E2)
    w3, b3 = lin(ks[4], ks[5], E2, n_cls)
    return {"w1": w1, "b1": b1, "w2": w2, "b2": b2, "w3": w3, "b3": b3}


def reference_forward(x, p):
    """Pure-JAX reference mirroring the kernel's dtypes (bf16 MXU inputs, fp32 accumulate)."""
    xb = x.astype(jnp.bfloat16)
    h = jnp.dot(xb, p["w1"].astype(jnp.bfloat16),
                preferred_element_type=jnp.float32) + p["b1"]
    h = jnp.maximum(h, 0.0)
    feat = jnp.dot(h.astype(jnp.bfloat16), p["w2"].astype(jnp.bfloat16),
                   preferred_element_type=jnp.float32) + p["b2"]
    logits = jnp.dot(feat, p["w3"], preferred_element_type=jnp.float32) + p["b3"]
    return {"logits": logits, "features": feat}


if __name__ == "__main__":
    key = jax.random.PRNGKey(0)
    kx, kp = jax.random.split(key)

    # Small stand-in shapes (production: E = 640 for ESM2-150M).
    B, E = 12, 64          # B=12 is deliberately ragged vs the TM=8 tile below
    # x plays the role of ESM(**batch_x).last_hidden_state[:, 0, :]
    x = jax.random.normal(kx, (B, E), jnp.float32)
    params = init_params(kp, E)

    # tm=8 -> grid of 2 steps, exercising batch tiling + ragged-B padding.
    out = esm_contrastive_forward(x, params, tm=8)
    jax.block_until_ready(out)

    ref = reference_forward(x, params)
    assert out["features"].shape == (B, E // 2)
    assert out["logits"].shape == (B, 3)
    assert jnp.allclose(out["features"], ref["features"], atol=1e-4, rtol=1e-4)
    assert jnp.allclose(out["logits"], ref["logits"], atol=1e-4, rtol=1e-4)

    print("KERNEL_OK")
</pallas_src>

<mosaic_0001>
module attributes {stable_mosaic.version = 11 : i64} {
  func.func @_mlp_head_kernel(%arg0: i32, %arg1: memref<8x64xbf16, #tpu.memory_space<vmem>>, %arg2: memref<64x64xbf16, #tpu.memory_space<vmem>>, %arg3: memref<1x64xf32, #tpu.memory_space<vmem>>, %arg4: memref<64x32xbf16, #tpu.memory_space<vmem>>, %arg5: memref<1x32xf32, #tpu.memory_space<vmem>>, %arg6: memref<32x128xf32, #tpu.memory_space<vmem>>, %arg7: memref<1x128xf32, #tpu.memory_space<vmem>>, %arg8: memref<8x32xf32, #tpu.memory_space<vmem>>, %arg9: memref<8x128xf32, #tpu.memory_space<vmem>>) attributes {dimension_semantics = [#tpu.dimension_semantics<parallel>], iteration_bounds = array<i64: 2>, scalar_prefetch = 0 : i64, scratch_operands = 0 : i64, tpu.core_type = #tpu.core_type<tc>, window_params = [{transform_indices = @transform_0, window_bounds = array<i64: 8, 64>}, {pipeline_mode = #tpu.pipeline_mode<synchronous>, transform_indices = @transform_1, window_bounds = array<i64: 64, 64>}, {pipeline_mode = #tpu.pipeline_mode<synchronous>, transform_indices = @transform_2, window_bounds = array<i64: 1, 64>}, {pipeline_mode = #tpu.pipeline_mode<synchronous>, transform_indices = @transform_3, window_bounds = array<i64: 64, 32>}, {pipeline_mode = #tpu.pipeline_mode<synchronous>, transform_indices = @transform_4, window_bounds = array<i64: 1, 32>}, {pipeline_mode = #tpu.pipeline_mode<synchronous>, transform_indices = @transform_5, window_bounds = array<i64: 32, 128>}, {pipeline_mode = #tpu.pipeline_mode<synchronous>, transform_indices = @transform_6, window_bounds = array<i64: 1, 128>}, {transform_indices = @transform_7, window_bounds = array<i64: 8, 32>}, {transform_indices = @transform_8, window_bounds = array<i64: 8, 128>}]} {
    %c0 = arith.constant 0 : index
    %c0_0 = arith.constant 0 : index
    %0 = vector.load %arg1[%c0, %c0_0] : memref<8x64xbf16, #tpu.memory_space<vmem>>, vector<8x64xbf16>
    %c0_1 = arith.constant 0 : index
    %c0_2 = arith.constant 0 : index
    %1 = vector.load %arg2[%c0_1, %c0_2] : memref<64x64xbf16, #tpu.memory_space<vmem>>, vector<64x64xbf16>
    %cst = arith.constant dense<0.000000e+00> : vector<8x64xf32>
    %2 = tpu.matmul %0, %1, %cst {dimension_numbers = #tpu.dot_dimension_numbers<[1], [0], [0], [1], [0, 0, 1, 1], [], []>} : vector<8x64xbf16>, vector<64x64xbf16>, vector<8x64xf32> -> vector<8x64xf32>
    %c0_3 = arith.constant 0 : index
    %c0_4 = arith.constant 0 : index
    %3 = vector.load %arg3[%c0_3, %c0_4] : memref<1x64xf32, #tpu.memory_space<vmem>>, vector<1x64xf32>
    %4 = vector.broadcast %3 : vector<1x64xf32> to vector<8x64xf32>
    %5 = arith.addf %2, %4 : vector<8x64xf32>
    %cst_5 = arith.constant 0.000000e+00 : f32
    %6 = vector.broadcast %cst_5 : f32 to vector<8x64xf32>
    %7 = arith.maximumf %5, %6 : vector<8x64xf32>
    %8 = arith.truncf %7 : vector<8x64xf32> to vector<8x64xbf16>
    %c0_6 = arith.constant 0 : index
    %c0_7 = arith.constant 0 : index
    %9 = vector.load %arg4[%c0_6, %c0_7] : memref<64x32xbf16, #tpu.memory_space<vmem>>, vector<64x32xbf16>
    %cst_8 = arith.constant dense<0.000000e+00> : vector<8x32xf32>
    %10 = tpu.matmul %8, %9, %cst_8 {dimension_numbers = #tpu.dot_dimension_numbers<[1], [0], [0], [1], [0, 0, 1, 1], [], []>} : vector<8x64xbf16>, vector<64x32xbf16>, vector<8x32xf32> -> vector<8x32xf32>
    %c0_9 = arith.constant 0 : index
    %c0_10 = arith.constant 0 : index
    %11 = vector.load %arg5[%c0_9, %c0_10] : memref<1x32xf32, #tpu.memory_space<vmem>>, vector<1x32xf32>
    %12 = vector.broadcast %11 : vector<1x32xf32> to vector<8x32xf32>
    %13 = arith.addf %10, %12 : vector<8x32xf32>
    %c0_11 = arith.constant 0 : index
    %c0_12 = arith.constant 0 : index
    %14 = vector.load %arg8[%c0_11, %c0_12] : memref<8x32xf32, #tpu.memory_space<vmem>>, vector<8x32xf32>
    tpu.vector_store %arg8[%c0_11, %c0_12], %13 {strides = array<i32>} : memref<8x32xf32, #tpu.memory_space<vmem>>, vector<8x32xf32>,
    %c0_13 = arith.constant 0 : index
    %c0_14 = arith.constant 0 : index
    %15 = vector.load %arg6[%c0_13, %c0_14] : memref<32x128xf32, #tpu.memory_space<vmem>>, vector<32x128xf32>
    %cst_15 = arith.constant dense<0.000000e+00> : vector<8x128xf32>
    %16 = tpu.matmul %13, %15, %cst_15 {dimension_numbers = #tpu.dot_dimension_numbers<[1], [0], [0], [1], [0, 0, 1, 1], [], []>} : vector<8x32xf32>, vector<32x128xf32>, vector<8x128xf32> -> vector<8x128xf32>
    %c0_16 = arith.constant 0 : index
    %c0_17 = arith.constant 0 : index
    %17 = vector.load %arg7[%c0_16, %c0_17] : memref<1x128xf32, #tpu.memory_space<vmem>>, vector<1x128xf32>
    %18 = vector.broadcast %17 : vector<1x128xf32> to vector<8x128xf32>
    %19 = arith.addf %16, %18 : vector<8x128xf32>
    %c0_18 = arith.constant 0 : index
    %c0_19 = arith.constant 0 : index
    %20 = vector.load %arg9[%c0_18, %c0_19] : memref<8x128xf32, #tpu.memory_space<vmem>>, vector<8x128xf32>
    tpu.vector_store %arg9[%c0_18, %c0_19], %19 {strides = array<i32>} : memref<8x128xf32, #tpu.memory_space<vmem>>, vector<8x128xf32>,
    return
  }
  func.func @transform_0(%arg0: i32) -> (i32, i32) {
    %c0_i32 = arith.constant 0 : i32
    %c0_i32_0 = arith.constant 0 : i32
    return %arg0, %c0_i32 : i32, i32
  }
  func.func @transform_1(%arg0: i32) -> (i32, i32) {
    %c0_i32 = arith.constant 0 : i32
    %c0_i32_0 = arith.constant 0 : i32
    %c0_i32_1 = arith.constant 0 : i32
    return %c0_i32, %c0_i32_0 : i32, i32
  }
  func.func @transform_2(%arg0: i32) -> (i32, i32) {
    %c0_i32 = arith.constant 0 : i32
    %c0_i32_0 = arith.constant 0 : i32
    %c0_i32_1 = arith.constant 0 : i32
    return %c0_i32, %c0_i32_0 : i32, i32
  }
  func.func @transform_3(%arg0: i32) -> (i32, i32) {
    %c0_i32 = arith.constant 0 : i32
    %c0_i32_0 = arith.constant 0 : i32
    %c0_i32_1 = arith.constant 0 : i32
    return %c0_i32, %c0_i32_0 : i32, i32
  }
  func.func @transform_4(%arg0: i32) -> (i32, i32) {
    %c0_i32 = arith.constant 0 : i32
    %c0_i32_0 = arith.constant 0 : i32
    %c0_i32_1 = arith.constant 0 : i32
    return %c0_i32, %c0_i32_0 : i32, i32
  }
  func.func @transform_5(%arg0: i32) -> (i32, i32) {
    %c0_i32 = arith.constant 0 : i32
    %c0_i32_0 = arith.constant 0 : i32
    %c0_i32_1 = arith.constant 0 : i32
    return %c0_i32, %c0_i32_0 : i32, i32
  }
  func.func @transform_6(%arg0: i32) -> (i32, i32) {
    %c0_i32 = arith.constant 0 : i32
    %c0_i32_0 = arith.constant 0 : i32
    %c0_i32_1 = arith.constant 0 : i32
    return %c0_i32, %c0_i32_0 : i32, i32
  }
  func.func @transform_7(%arg0: i32) -> (i32, i32) {
    %c0_i32 = arith.constant 0 : i32
    %c0_i32_0 = arith.constant 0 : i32
    return %arg0, %c0_i32 : i32, i32
  }
  func.func @transform_8(%arg0: i32) -> (i32, i32) {
    %c0_i32 = arith.constant 0 : i32
    %c0_i32_0 = arith.constant 0 : i32
    return %arg0, %c0_i32 : i32, i32
  }
}

</mosaic_0001>

<llo_original>
// kernel: esm_contrastive_forward.1
$region0: #{esm_contrastive_forward.1}
  #allocation0 [shape = 'u32[]', space=smem, size = 0x4, offset = 0x4, fixed_abs, tag = 'smem constant byte address 0x4 - core index']
  #allocation1 [shape = 'u32[72,128]{1,0:T(1,128)}', space=vmem, size = 0x9000, scoped, tag = 'internal scratch']
  %s0 = inlined_call_operand.vmem [shape: bf16[16,64], index: 0, kind: input, shape index: {}]
  %s1 = inlined_call_operand.vmem [shape: bf16[64,64], index: 1, kind: input, shape index: {}]
  %s2 = inlined_call_operand.vmem [shape: f32[1,64], index: 2, kind: input, shape index: {}]
  %s3 = inlined_call_operand.vmem [shape: bf16[64,32], index: 3, kind: input, shape index: {}]
  %s4 = inlined_call_operand.vmem [shape: f32[1,32], index: 4, kind: input, shape index: {}]
  %s5 = inlined_call_operand.vmem [shape: f32[32,128], index: 5, kind: input, shape index: {}]
  %s6 = inlined_call_operand.vmem [shape: f32[1,128], index: 6, kind: input, shape index: {}]
  %s7 = inlined_call_operand.hbm [shape: f32[16,32], index: 7, kind: output, shape index: {0}]
  %s8 = inlined_call_operand.vmem [shape: f32[16,128], index: 8, kind: output, shape index: {1}]
  %9 = xla_tuple %s7, %s8
  %s10 = sld [smem:[#allocation0]]
  $region69: #{esm_contrastive_forward.1} parent=0
    _
  %s12 = ssub.s32 1, %s10
  %s13 = scalar_select 0, %s12, %s10
  $region1: #{esm_contrastive_forward.1} parent=0
    #allocation2 [shape = 'u8[8192]{0}', space=vmem, size = 0x2000, scoped, tag = 'output window, operand 0']
    #allocation3 [shape = 's32[2]{0}', space=sflag, size = 0x8, scoped, tag = 'scoped memory for esm_contrastive_forward.1']
    %14 = vsyncpa [#allocation3], 0
    %s15 = scalar_lea.sflag [#allocation3], 1
    %16 = vsyncpa %s15, 0
    loop: start=0, step=1, limit=4
    $region2: #{esm_contrastive_forward.1} parent=1 // loop_pre_header
      _
    $region3: #{esm_contrastive_forward.1} parent=1 // loop_header
      %s18 = sphi 0, %s22
      %p19 = scmp.ge.s32.totalorder %s18, 4
      %s28 = sphi 0, %s30
      %s31 = sphi 0, %s28
      %s32 = sphi 0, %s31
      %s48 = sphi 0, %s32
      %s52 = sphi 0, %s52
      %s54 = sphi 0, %s52
      %s55 = sphi 0, %s54
      %s69 = sphi 0, %s55
      %s73 = sphi 0, %s73
      %s75 = sphi 0, %s73
      %s76 = sphi 0, %s75
      %s90 = sphi 0, %s76
      %s94 = sphi 0, %s94
      %s96 = sphi 0, %s94
      %s97 = sphi 0, %s96
      %s111 = sphi 0, %s97
      %s115 = sphi 0, %s115
      %s117 = sphi 0, %s115
      %s118 = sphi 0, %s117
      %s132 = sphi 0, %s118
      %s136 = sphi 0, %s136
      %s138 = sphi 0, %s136
      %s139 = sphi 0, %s138
      %s153 = sphi 0, %s139
      %s157 = sphi 0, %s157
      %s159 = sphi 0, %s157
      %s160 = sphi 0, %s159
      %s174 = sphi 0, %s160
      %s180 = sphi 0, %s182
      %s183 = sphi 0, %s180
      %s184 = sphi 0, %s183
      %s200 = sphi 0, %s184
      %s206 = sphi 0, %s208
      %s209 = sphi 0, %s206
      %s210 = sphi 0, %s209
      %s226 = sphi 0, %s210
    $region4: #{esm_contrastive_forward.1} parent=1 // loop_header_branch
      %21 = sbr.rel (%p19) target = $region8
    $region5: #{esm_contrastive_forward.1} parent=1 // loop_body
      %s23 = ssub.s32 %s18, 1
      %s24 = ssub.s32 %s18, 2
      %s25 = sadd.s32 %s18, 1
      %s26 = ssub.s32 %s18, %s25
      %p27 = scmp.eq.s32.totalorder %s26, 0
      %s29 = sadd.s32 %s28, 1
      %s30 = scalar_select %p27, %s28, %s29
      %p33 = pneg %p27
      %p34 = scmp.eq.s32.totalorder %s18, 1
      %p35 = por %p33, %p34
      %p36 = scmp.ne.s32.totalorder %s28, %s31
      %p37 = scmp.eq.s32.totalorder %s18, 0
      %p38 = por %p36, %p37
      %p39 = scmp.ne.s32.totalorder %s28, %s31
      %p40 = scmp.eq.s32.totalorder %s23, 1
      %p41 = por %p39, %p40
      %p42 = scmp.ne.s32.totalorder %s31, %s32
      %p43 = scmp.eq.s32.totalorder %s23, 0
      %p44 = por %p42, %p43
      %p45 = scmp.ne.s32.totalorder %s31, %s32
      %p46 = scmp.eq.s32.totalorder %s24, 1
      %p47 = por %p45, %p46
      %p49 = scmp.ne.s32.totalorder %s32, %s48
      %p50 = scmp.eq.s32.totalorder %s24, 0
      %p51 = por %p49, %p50
      %s53 = sadd.s32 %s52, 1
      %p56 = scmp.eq.s32.totalorder %s18, 1
      %p57 = scmp.ne.s32.totalorder %s52, %s54
      %p58 = scmp.eq.s32.totalorder %s18, 0
      %p59 = por %p57, %p58
      %p60 = scmp.ne.s32.totalorder %s52, %s54
      %p61 = scmp.eq.s32.totalorder %s23, 1
      %p62 = por %p60, %p61
      %p63 = scmp.ne.s32.totalorder %s54, %s55
      %p64 = scmp.eq.s32.totalorder %s23, 0
      %p65 = por %p63, %p64
      %p66 = scmp.ne.s32.totalorder %s54, %s55
      %p67 = scmp.eq.s32.totalorder %s24, 1
      %p68 = por %p66, %p67
      %p70 = scmp.ne.s32.totalorder %s55, %s69
      %p71 = scmp.eq.s32.totalorder %s24, 0
      %p72 = por %p70, %p71
      %s74 = sadd.s32 %s73, 1
      %p77 = scmp.eq.s32.totalorder %s18, 1
      %p78 = scmp.ne.s32.totalorder %s73, %s75
      %p79 = scmp.eq.s32.totalorder %s18, 0
      %p80 = por %p78, %p79
      %p81 = scmp.ne.s32.totalorder %s73, %s75
      %p82 = scmp.eq.s32.totalorder %s23, 1
      %p83 = por %p81, %p82
      %p84 = scmp.ne.s32.totalorder %s75, %s76
      %p85 = scmp.eq.s32.totalorder %s23, 0
      %p86 = por %p84, %p85
      %p87 = scmp.ne.s32.totalorder %s75, %s76
      %p88 = scmp.eq.s32.totalorder %s24, 1
      %p89 = por %p87, %p88
      %p91 = scmp.ne.s32.totalorder %s76, %s90
      %p92 = scmp.eq.s32.totalorder %s24, 0
      %p93 = por %p91, %p92
      %s95 = sadd.s32 %s94, 1
      %p98 = scmp.eq.s32.totalorder %s18, 1
      %p99 = scmp.ne.s32.totalorder %s94, %s96
      %p100 = scmp.eq.s32.totalorder %s18, 0
      %p101 = por %p99, %p100
      %p102 = scmp.ne.s32.totalorder %s94, %s96
      %p103 = scmp.eq.s32.totalorder %s23, 1
      %p104 = por %p102, %p103
      %p105 = scmp.ne.s32.totalorder %s96, %s97
      %p106 = scmp.eq.s32.totalorder %s23, 0
      %p107 = por %p105, %p106
      %p108 = scmp.ne.s32.totalorder %s96, %s97
      %p109 = scmp.eq.s32.totalorder %s24, 1
      %p110 = por %p108, %p109
      %p112 = scmp.ne.s32.totalorder %s97, %s111
      %p113 = scmp.eq.s32.totalorder %s24, 0
      %p114 = por %p112, %p113
      %s116 = sadd.s32 %s115, 1
      %p119 = scmp.eq.s32.totalorder %s18, 1
      %p120 = scmp.ne.s32.totalorder %s115, %s117
      %p121 = scmp.eq.s32.totalorder %s18, 0
      %p122 = por %p120, %p121
      %p123 = scmp.ne.s32.totalorder %s115, %s117
      %p124 = scmp.eq.s32.totalorder %s23, 1
      %p125 = por %p123, %p124
      %p126 = scmp.ne.s32.totalorder %s117, %s118
      %p127 = scmp.eq.s32.totalorder %s23, 0
      %p128 = por %p126, %p127
      %p129 = scmp.ne.s32.totalorder %s117, %s118
      %p130 = scmp.eq.s32.totalorder %s24, 1
      %p131 = por %p129, %p130
      %p133 = scmp.ne.s32.totalorder %s118, %s132
      %p134 = scmp.eq.s32.totalorder %s24, 0
      %p135 = por %p133, %p134
      %s137 = sadd.s32 %s136, 1
      %p140 = scmp.eq.s32.totalorder %s18, 1
      %p141 = scmp.ne.s32.totalorder %s136, %s138
      %p142 = scmp.eq.s32.totalorder %s18, 0
      %p143 = por %p141, %p142
      %p144 = scmp.ne.s32.totalorder %s136, %s138
      %p145 = scmp.eq.s32.totalorder %s23, 1
      %p146 = por %p144, %p145
      %p147 = scmp.ne.s32.totalorder %s138, %s139
      %p148 = scmp.eq.s32.totalorder %s23, 0
      %p149 = por %p147, %p148
      %p150 = scmp.ne.s32.totalorder %s138, %s139
      %p151 = scmp.eq.s32.totalorder %s24, 1
      %p152 = por %p150, %p151
      %p154 = scmp.ne.s32.totalorder %s139, %s153
      %p155 = scmp.eq.s32.totalorder %s24, 0
      %p156 = por %p154, %p155
      %s158 = sadd.s32 %s157, 1
      %p161 = scmp.eq.s32.totalorder %s18, 1
      %p162 = scmp.ne.s32.totalorder %s157, %s159
      %p163 = scmp.eq.s32.totalorder %s18, 0
      %p164 = por %p162, %p163
      %p165 = scmp.ne.s32.totalorder %s157, %s159
      %p166 = scmp.eq.s32.totalorder %s23, 1
      %p167 = por %p165, %p166
      %p168 = scmp.ne.s32.totalorder %s159, %s160
      %p169 = scmp.eq.s32.totalorder %s23, 0
      %p170 = por %p168, %p169
      %p171 = scmp.ne.s32.totalorder %s159, %s160
      %p172 = scmp.eq.s32.totalorder %s24, 1
      %p173 = por %p171, %p172
      %p175 = scmp.ne.s32.totalorder %s160, %s174
      %p176 = scmp.eq.s32.totalorder %s24, 0
      %p177 = por %p175, %p176
      %s178 = ssub.s32 %s18, %s25
      %p179 = scmp.eq.s32.totalorder %s178, 0
      %s181 = sadd.s32 %s180, 1
      %s182 = scalar_select %p179, %s180, %s181
      %p185 = pneg %p179
      %p186 = scmp.eq.s32.totalorder %s18, 1
      %p187 = por %p185, %p186
      %p188 = scmp.ne.s32.totalorder %s180, %s183
      %p189 = scmp.eq.s32.totalorder %s18, 0
      %p190 = por %p188, %p189
      %p191 = scmp.ne.s32.totalorder %s180, %s183
      %p192 = scmp.eq.s32.totalorder %s23, 1
      %p193 = por %p191, %p192
      %p194 = scmp.ne.s32.totalorder %s183, %s184
      %p195 = scmp.eq.s32.totalorder %s23, 0
      %p196 = por %p194, %p195
      %p197 = scmp.ne.s32.totalorder %s183, %s184
      %p198 = scmp.eq.s32.totalorder %s24, 1
      %p199 = por %p197, %p198
      %p201 = scmp.ne.s32.totalorder %s184, %s200
      %p202 = scmp.eq.s32.totalorder %s24, 0
      %p203 = por %p201, %p202
      %s204 = ssub.s32 %s18, %s25
      %p205 = scmp.eq.s32.totalorder %s204, 0
      %s207 = sadd.s32 %s206, 1
      %s208 = scalar_select %p205, %s206, %s207
      %p211 = pneg %p205
      %p212 = scmp.eq.s32.totalorder %s18, 1
      %p213 = por %p211, %p212
      %p214 = scmp.ne.s32.totalorder %s206, %s209
      %p215 = scmp.eq.s32.totalorder %s18, 0
      %p216 = por %p214, %p215
      %p217 = scmp.ne.s32.totalorder %s206, %s209
      %p218 = scmp.eq.s32.totalorder %s23, 1
      %p219 = por %p217, %p218
      %p220 = scmp.ne.s32.totalorder %s209, %s210
      %p221 = scmp.eq.s32.totalorder %s23, 0
      %p222 = por %p220, %p221
      %p223 = scmp.ne.s32.totalorder %s209, %s210
      %p224 = scmp.eq.s32.totalorder %s24, 1
      %p225 = por %p223, %p224
      %p227 = scmp.ne.s32.totalorder %s210, %s226
      %p228 = scmp.eq.s32.totalorder %s24, 0
      %p229 = por %p227, %p228
      %p230 = scmp.le.s32.totalorder 1, %s18
      %p231 = scmp.lt.s32.totalorder %s18, 3
      %p232 = pnand %p230, %p231
      %p233 = pneg %p232
      // Predicated region
      $region9: #{esm_contrastive_forward.1} parent=5 // pred_check
        _
      $region10: #{esm_contrastive_forward.1} parent=5 // pred_check_branch
        %235 = sbr.rel (%p232) target = $region12
      $region11: #{esm_contrastive_forward.1} parent=5 // pred_region
        %s236 = ssub.s32 %s18, 1
        // Predicated region
        $region13: #{esm_contrastive_forward.1} parent=11 // pred_check
          %p237 = pneg %p65
        $region14: #{esm_contrastive_forward.1} parent=11 // pred_check_branch
          %239 = sbr.rel (%p237) target = $region16
        $region15: #{esm_contrastive_forward.1} parent=11 // pred_region
          _
        $region16: #{esm_contrastive_forward.1} parent=11 // pred_fallthru
          _
        // Predicated region
        $region17: #{esm_contrastive_forward.1} parent=11 // pred_check
          %p240 = pneg %p86
        $region18: #{esm_contrastive_forward.1} parent=11 // pred_check_branch
          %242 = sbr.rel (%p240) target = $region20
        $region19: #{esm_contrastive_forward.1} parent=11 // pred_region
          _
        $region20: #{esm_contrastive_forward.1} parent=11 // pred_fallthru
          _
        // Predicated region
        $region21: #{esm_contrastive_forward.1} parent=11 // pred_check
          %p243 = pneg %p107
        $region22: #{esm_contrastive_forward.1} parent=11 // pred_check_branch
          %245 = sbr.rel (%p243) target = $region24
        $region23: #{esm_contrastive_forward.1} parent=11 // pred_region
          _
        $region24: #{esm_contrastive_forward.1} parent=11 // pred_fallthru
          _
        // Predicated region
        $region25: #{esm_contrastive_forward.1} parent=11 // pred_check
          %p246 = pneg %p128
        $region26: #{esm_contrastive_forward.1} parent=11 // pred_check_branch
          %248 = sbr.rel (%p246) target = $region28
        $region27: #{esm_contrastive_forward.1} parent=11 // pred_region
          _
        $region28: #{esm_contrastive_forward.1} parent=11 // pred_fallthru
          _
        // Predicated region
        $region29: #{esm_contrastive_forward.1} parent=11 // pred_check
          %p249 = pneg %p149
        $region30: #{esm_contrastive_forward.1} parent=11 // pred_check_branch
          %251 = sbr.rel (%p249) target = $region32
        $region31: #{esm_contrastive_forward.1} parent=11 // pred_region
          _
        $region32: #{esm_contrastive_forward.1} parent=11 // pred_fallthru
          _
        // Predicated region
        $region33: #{esm_contrastive_forward.1} parent=11 // pred_check
          %p252 = pneg %p170
        $region34: #{esm_contrastive_forward.1} parent=11 // pred_check_branch
          %254 = sbr.rel (%p252) target = $region36
        $region35: #{esm_contrastive_forward.1} parent=11 // pred_region
          _
        $region36: #{esm_contrastive_forward.1} parent=11 // pred_fallthru
          _
      $region12: #{esm_contrastive_forward.1} parent=5 // pred_fallthru
        _
      %p255 = scmp.lt.s32.totalorder %s18, 2
      // Predicated region
      $region37: #{esm_contrastive_forward.1} parent=5 // pred_check
        %p256 = pneg %p255
      $region38: #{esm_contrastive_forward.1} parent=5 // pred_check_branch
        %258 = sbr.rel (%p256) target = $region40
      $region39: #{esm_contrastive_forward.1} parent=5 // pred_region
        // Predicated region
        $region41: #{esm_contrastive_forward.1} parent=39 // pred_check
          %p259 = pneg %p38
        $region42: #{esm_contrastive_forward.1} parent=39 // pred_check_branch
          %261 = sbr.rel (%p259) target = $region44
        $region43: #{esm_contrastive_forward.1} parent=39 // pred_region
          %p262 = scmp.lt.s32.totalorder %s18, 1
          %s263 = scalar_select %p262, %s18, 1
          %s264 = smul.addr %s263, 4
          %s265 = scalar_lea.vmem %s0, %s264
        $region44: #{esm_contrastive_forward.1} parent=39 // pred_fallthru
          _
      $region40: #{esm_contrastive_forward.1} parent=5 // pred_fallthru
        _
      %p266 = scmp.le.s32.totalorder 1, %s18
      %p267 = scmp.lt.s32.totalorder %s18, 3
      %p268 = pnand %p266, %p267
      %p269 = pneg %p268
      // Predicated region
      $region45: #{esm_contrastive_forward.1} parent=5 // pred_check
        _
      $region46: #{esm_contrastive_forward.1} parent=5 // pred_check_branch
        %271 = sbr.rel (%p268) target = $region48
      $region47: #{esm_contrastive_forward.1} parent=5 // pred_region
        %s272 = ssub.s32 %s18, 1
        %p273 = scmp.lt.s32.totalorder %s23, 1
        %s274 = scalar_select %p273, %s23, 1
        %s275 = smul.addr %s274, 4
        %s276 = scalar_lea.vmem %s0, %s275
        %p277 = pneg %p44
        %p278 = pneg %p41
        %p279 = pneg %p65
        %p280 = pneg %p62
        %p281 = pneg %p86
        %p282 = pneg %p83
        %p283 = pneg %p107
        %p284 = pneg %p104
        %p285 = pneg %p128
        %p286 = pneg %p125
        %p287 = pneg %p149
        %p288 = pneg %p146
        %p289 = pneg %p170
        %p290 = pneg %p167
        %p291 = pneg %p196
        %p292 = pneg %p193
        %s293 = sand.u32 %s183, 1
        %s294 = scalar_lea.sflag [#allocation3], %s293
        %s295 = sand.u32 %s183, 1
        %s296 = smul.addr %s295, 8
        %s297 = scalar_lea.vmem [#allocation2], %s296
        %p298 = pneg %p222
        %p299 = pneg %p219
        %p300 = scmp.lt.s32.totalorder %s23, 1
        %s301 = scalar_select %p300, %s23, 1
        %s302 = smul.addr %s301, 8
        %s303 = scalar_lea.vmem %s8, %s302
        %p304 = scmp.lt.s32.totalorder %s23, 1
        %s305 = scalar_select %p304, %s23, 1
        %s306 = smul.addr %s305, 4
        %s307 = scalar_lea.vmem %s0, %s306
        %p308 = scmp.lt.s32.totalorder %s23, 1
        %s309 = scalar_select %p308, %s23, 1
        %s310 = smul.addr %s309, 8
        %s311 = scalar_lea.vmem %s8, %s310
        %v313 = vld [vmem:[%s307] sm:$0xf]
        %v314 = vld [vmem:[%s1] sm:$0xf]
        %v315 = vld [vmem:[%s1 + $0x4] sm:$0xf]
        %v316 = vld [vmem:[%s1 + $0x8] sm:$0xf]
        %v317 = vld [vmem:[%s1 + $0xc] sm:$0xf]
        %v318 = vld [vmem:[%s1 + $0x10] sm:$0xf]
        %v319 = vld [vmem:[%s1 + $0x14] sm:$0xf]
        %v320 = vld [vmem:[%s1 + $0x18] sm:$0xf]
        %v321 = vld [vmem:[%s1 + $0x1c] sm:$0xf]
        %v322 = vld [vmem:[%s2] sm:$0x1]
        %v324 = vperm.slane %v322, 0
        %v334 = vunpack.c.l.b16 %v314
        %v335 = vunpack.c.l.b16 %v315
        %v336 = vunpack.c.l.b16 %v316
        %v337 = vunpack.c.l.b16 %v317
        %v338 = vunpack.c.l.b16 %v318
        %v339 = vunpack.c.l.b16 %v319
        %v340 = vunpack.c.l.b16 %v320
        %v341 = vunpack.c.l.b16 %v321
        %v342 = vpack.c.b16 %v335, %v334
        %v343 = vpack.c.b16 %v337, %v336
        %v344 = vpack.c.b16 %v339, %v338
        %v345 = vpack.c.b16 %v341, %v340
        %vm350 = vcmask 523264
        %v352 = vsel %vm350, %v313, 0
        %354 = vmatpush.bf16.msra.mxu0 0
        %355 = vmatpush.bf16.msra.mxu0 0
        %356 = vmatpush.bf16.msra.mxu0 0
        %357 = vmatpush.bf16.msra.mxu0 0
        %358 = vmatpush.bf16.msra.mxu0 %v345
        %359 = vmatpush.bf16.msra.mxu0 %v344
        %360 = vmatpush.bf16.msra.mxu0 %v343
        %361 = vmatpush.bf16.msra.mxu0 %v342
        %362 = vmatmul.bf16.gmra.mxu0 %v352
        %v363 = vpop.f32.mrf.mxu0
        %v364 = vadd.f32 %v324, %v363
        %v365 = vpop.f32.mrf.mxu0
        %366 = vdwg.mxu0
        %v367 = vmax.f32 %v364, 0.0
        %v368 = vpack.c.bf16 %v367, %v367
        %v369 = vld [vmem:[%s3] sm:$0xf]
        %v370 = vld [vmem:[%s3 + $0x4] sm:$0xf]
        %v371 = vld [vmem:[%s3 + $0x8] sm:$0xf]
        %v372 = vld [vmem:[%s3 + $0xc] sm:$0xf]
        %v373 = vld [vmem:[%s3 + $0x10] sm:$0xf]
        %v374 = vld [vmem:[%s3 + $0x14] sm:$0xf]
        %v375 = vld [vmem:[%s3 + $0x18] sm:$0xf]
        %v376 = vld [vmem:[%s3 + $0x1c] sm:$0xf]
        %v377 = vld [vmem:[%s4] sm:$0x1]
        %v379 = vperm.slane %v377, 0
        %v389 = vunpack.c.l.b16 %v369
        %v390 = vunpack.c.l.b16 %v370
        %v391 = vunpack.c.l.b16 %v371
        %v392 = vunpack.c.l.b16 %v372
        %v393 = vunpack.c.l.b16 %v373
        %v394 = vunpack.c.l.b16 %v374
        %v395 = vunpack.c.l.b16 %v375
        %v396 = vunpack.c.l.b16 %v376
        %v397 = vpack.c.b16 %v390, %v389
        %v398 = vpack.c.b16 %v392, %v391
        %v399 = vpack.c.b16 %v394, %v393
        %v400 = vpack.c.b16 %v396, %v395
        %v406 = vsel %vm350, %v368, 0
        %408 = vmatpush.bf16.msra.mxu0 0
        %409 = vmatpush.bf16.msra.mxu0 0
        %410 = vmatpush.bf16.msra.mxu0 0
        %411 = vmatpush.bf16.msra.mxu0 0
        %412 = vmatpush.bf16.msra.mxu0 %v400
        %413 = vmatpush.bf16.msra.mxu0 %v399
        %414 = vmatpush.bf16.msra.mxu0 %v398
        %415 = vmatpush.bf16.msra.mxu0 %v397
        %416 = vmatmul.bf16.gmra.mxu0 %v406
        %v417 = vpop.f32.mrf.mxu0
        %v418 = vadd.f32 %v379, %v417
        %v419 = vpop.f32.mrf.mxu0
        %420 = vdwg.mxu0
        %vm421 = vcmask 261120
        %422 = vst.msk [vmem:[%s297] sm:$0xff] %vm421, %v418
        %v423 = vld [vmem:[%s5] sm:$0xff]
        %v424 = vld [vmem:[%s5 + $0x8] sm:$0xff]
        %v425 = vld [vmem:[%s5 + $0x10] sm:$0xff]
        %v426 = vld [vmem:[%s5 + $0x18] sm:$0xff]
        %v427 = vld [vmem:[%s6] sm:$0x1]
        %v429 = vperm.slane %v427, 0
        %v432 = vsel %vm421, %v418, 0
        %434 = vmatpush.msra.mxu0 0.0
        %435 = vmatpush.msra.mxu0 0.0
        %436 = vmatpush.msra.mxu0 0.0
        %437 = vmatpush.msra.mxu0 0.0
        %438 = vmatpush.msra.mxu0 0.0
        %439 = vmatpush.msra.mxu0 0.0
        %440 = vmatpush.msra.mxu0 0.0
        %441 = vmatpush.msra.mxu0 0.0
        %442 = vmatpush.msra.mxu0 0.0
        %443 = vmatpush.msra.mxu0 0.0
        %444 = vmatpush.msra.mxu0 0.0
        %445 = vmatpush.msra.mxu0 0.0
        %446 = vmatpush.msra.mxu0 %v426
        %447 = vmatpush.msra.mxu0 %v425
        %448 = vmatpush.msra.mxu0 %v424
        %449 = vmatpush.msra.mxu0 %v423
        %450 = vmatmul.f32.gmra.mxu0 %v432
        %v451 = vpop.f32.mrf.mxu0
        %v452 = vadd.f32 %v429, %v451
        %453 = vdwg.mxu0
        %454 = vst [vmem:[%s311] sm:$0xff] %v452
        %s455 = sand.u32 %s183, 1
        %s456 = scalar_lea.sflag [#allocation3], %s455
        %s457 = sand.u32 %s183, 1
        %s458 = smul.addr %s457, 8
        %s459 = scalar_lea.vmem [#allocation2], %s458
        %p460 = scmp.lt.s32.totalorder %s23, 1
        %s461 = scalar_select %p460, %s23, 1
        %s462 = smul.addr %s461, 8
        %s463 = scalar_lea.vmem %s8, %s462
        // Predicated region
        $region49: #{esm_contrastive_forward.1} parent=47 // pred_check
          %p464 = pneg %p193
        $region50: #{esm_contrastive_forward.1} parent=47 // pred_check_branch
          %466 = sbr.rel (%p464) target = $region52
        $region51: #{esm_contrastive_forward.1} parent=47 // pred_region
          %468 = vsyncadd %s456, 0
          %s469 = smul.addr %s23, 8
          %s470 = scalar_lea.hbm %s7, %s469
          %s472 = sshll.u32 %s459, 4
          %s473 = int_to_ptr.vmem [resolvable:$true] %s472
          %s474 = sshll.u32 %s470, 4
          %s475 = int_to_ptr.hbm [resolvable:$true] %s474
          %477 = dma.vmem_to_hbm [thread:$0]  %s473, 128, %s475, %s456
        $region52: #{esm_contrastive_forward.1} parent=47 // pred_fallthru
          _
        // Predicated region
        $region53: #{esm_contrastive_forward.1} parent=47 // pred_check
          %p478 = pneg %p219
        $region54: #{esm_contrastive_forward.1} parent=47 // pred_check_branch
          %480 = sbr.rel (%p478) target = $region56
        $region55: #{esm_contrastive_forward.1} parent=47 // pred_region
          _
        $region56: #{esm_contrastive_forward.1} parent=47 // pred_fallthru
          _
      $region48: #{esm_contrastive_forward.1} parent=5 // pred_fallthru
        _
      %p481 = scmp.le.s32.totalorder 2, %s18
      // Predicated region
      $region57: #{esm_contrastive_forward.1} parent=5 // pred_check
        %p482 = pneg %p481
      $region58: #{esm_contrastive_forward.1} parent=5 // pred_check_branch
        %484 = sbr.rel (%p482) target = $region60
      $region59: #{esm_contrastive_forward.1} parent=5 // pred_region
        %s485 = ssub.s32 %s18, 2
        // Predicated region
        $region61: #{esm_contrastive_forward.1} parent=59 // pred_check
          %p486 = pneg %p199
        $region62: #{esm_contrastive_forward.1} parent=59 // pred_check_branch
          %488 = sbr.rel (%p486) target = $region64
        $region63: #{esm_contrastive_forward.1} parent=59 // pred_region
          %s489 = sand.u32 %s184, 1
          %s490 = scalar_lea.sflag [#allocation3], %s489
          %s491 = sand.u32 %s184, 1
          %s492 = smul.addr %s491, 8
          %s493 = scalar_lea.vmem [#allocation2], %s492
          %495 = dma.done %s490, 128
        $region64: #{esm_contrastive_forward.1} parent=59 // pred_fallthru
          _
        // Predicated region
        $region65: #{esm_contrastive_forward.1} parent=59 // pred_check
          %p496 = pneg %p225
        $region66: #{esm_contrastive_forward.1} parent=59 // pred_check_branch
          %498 = sbr.rel (%p496) target = $region68
        $region67: #{esm_contrastive_forward.1} parent=59 // pred_region
          %p499 = scmp.lt.s32.totalorder %s24, 1
          %s500 = scalar_select %p499, %s24, 1
          %s501 = smul.addr %s500, 8
          %s502 = scalar_lea.vmem %s8, %s501
        $region68: #{esm_contrastive_forward.1} parent=59 // pred_fallthru
          _
      $region60: #{esm_contrastive_forward.1} parent=5 // pred_fallthru
        _
    $region6: #{esm_contrastive_forward.1} parent=1 // loop_footer
      %s22 = sadd.s32 1, %s18
    $region7: #{esm_contrastive_forward.1} parent=1 // loop_footer_branch
      %17 = sbr.rel target = $region3
    $region8: #{esm_contrastive_forward.1} parent=1 // loop_exit
      _
    %503 = vsyncpa [#allocation3], 1
    %s504 = scalar_lea.sflag [#allocation3], 1
    %505 = vsyncpa %s504, 1

</llo_original>
